<compile_context>
chip_gen: v5e
topology: v5e:2x2
jax: 0.10.0
libtpu: 0.0.40
codegen_flags: <defaults>
</compile_context>

<pallas_src>
import jax
import jax.numpy as jnp
from jax.experimental import pallas as pl
from jax.experimental.pallas import tpu as pltpu

_LANES = 128
_BLOCK_ELEMS = 128 * 1024          # 512 KiB of f32 per input block


def _make_kernel(tm, w, inner, rows, needs_mask):
    """tm/w: block shape; inner: grid steps per core; rows: valid rows; all static."""

    def kernel(x_ref, t_ref, o_ref):
        c = pl.program_id(0)       # TensorCore split ("parallel")
        j = pl.program_id(1)       # reduction steps   ("arbitrary")

        @pl.when(j == 0)
        def _init():
            o_ref[...] = jnp.zeros_like(o_ref)

        x = x_ref[...].astype(jnp.float32)
        t = t_ref[...].astype(jnp.float32)

        # Stable softplus + log-sigmoid identities.
        sp_x = jnp.maximum(x, 0.0) + jnp.log1p(jnp.exp(-jnp.abs(x)))
        sp_t = jnp.maximum(t, 0.0) + jnp.log1p(jnp.exp(-jnp.abs(t)))
        q = jnp.exp(t - sp_t)                       # sigmoid(t), single EUP op
        term = q * (t - x) + (sp_x - sp_t)

        if needs_mask:
            # Zero out rows past the logical end (ragged last tile / phantom tile).
            row0 = (c * inner + j) * tm
            rid = row0 + jax.lax.broadcasted_iota(jnp.int32, (tm, w), 0)
            term = jnp.where(rid < rows, term, 0.0)

        # Per-lane partial sums (VALU adds + one small sublane reduce per block);
        # the full cross-lane reduction is deferred to the wrapper.
        part = jnp.sum(term, axis=0, keepdims=True)     # (1, w)
        o_ref[...] += part[None]                        # (1, 1, w), resident across j

    return kernel


def _choose_lane_width(n):
    """Widest lane-dense layout that divides n; else fall back to padding to 128."""
    for w in (512, 256, 128):
        if n % w == 0:
            return w, 0
    padded = pl.cdiv(n, _LANES) * _LANES
    return _LANES, padded - n


def kld_loss(input_logits, target_logits):
    assert input_logits.shape == target_logits.shape
    n = input_logits.size

    x = input_logits.reshape(-1)
    t = target_logits.reshape(-1)

    w, pad = _choose_lane_width(n)
    if pad:
        # Rare fallback for sizes not a multiple of 128 lanes.
        # Zero logits -> p = q = 0.5 -> exactly zero KL contribution.
        x = jnp.pad(x, (0, pad))
        t = jnp.pad(t, (0, pad))
    rows = (n + pad) // w
    x2 = x.reshape(rows, w)
    t2 = t.reshape(rows, w)

    tm_target = max(8, _BLOCK_ELEMS // w)
    if rows <= tm_target:
        tm, n_tiles = rows, 1          # single full-height block (rows == full dim is legal)
    else:
        tm = tm_target                 # multiple of 8 by construction
        n_tiles = pl.cdiv(rows, tm)

    nc = 2 if n_tiles >= 2 else 1      # leading "parallel" axis -> both v7x TensorCores
    inner = pl.cdiv(n_tiles, nc)
    needs_mask = (nc * inner * tm) != rows

    def in_map(c, j):
        # Clamp phantom tiles (odd tile counts) onto the last real tile; their
        # contribution is zeroed by the in-kernel row mask.
        return (jnp.minimum(c * inner + j, n_tiles - 1), 0)

    kernel = _make_kernel(tm, w, inner, rows, needs_mask)

    partials = pl.pallas_call(
        kernel,
        out_shape=jax.ShapeDtypeStruct((nc, 1, w), jnp.float32),
        grid_spec=pltpu.PrefetchScalarGridSpec(
            num_scalar_prefetch=0,
            grid=(nc, inner),
            in_specs=[
                pl.BlockSpec((tm, w), in_map),
                pl.BlockSpec((tm, w), in_map),
            ],
            out_specs=pl.BlockSpec((1, 1, w), lambda c, j: (c, 0, 0)),
        ),
        compiler_params=pltpu.CompilerParams(
            dimension_semantics=("parallel", "arbitrary"),
        ),
    )(x2, t2)

    # batchmean: divide by total (unpadded) element count.
    return (jnp.sum(partials) / jnp.float32(n)).astype(jnp.float32)


def _reference(input_logits, target_logits):
    # Literal PyTorch-style computation (sigmoid -> logs -> batchmean KL).
    p = jax.nn.sigmoid(input_logits.astype(jnp.float32)).reshape(-1)
    q = jax.nn.sigmoid(target_logits.astype(jnp.float32)).reshape(-1)
    term = q * (jnp.log(q) - jnp.log(p)) + (1.0 - q) * (
        jnp.log(1.0 - q) - jnp.log(1.0 - p)
    )
    return jnp.sum(term) / p.size


if __name__ == "__main__":
    # Primary small test: NCHW logits consistent with the module's forward.
    k1, k2 = jax.random.split(jax.random.PRNGKey(0))
    x = jax.random.normal(k1, (2, 4, 16, 16), dtype=jnp.float32)
    t = jax.random.normal(k2, (2, 4, 16, 16), dtype=jnp.float32)
    out = kld_loss(x, t)
    jax.block_until_ready(out)
    ref = _reference(x, t)
    assert jnp.allclose(out, ref, rtol=5e-5, atol=1e-6), (out, ref)

    # Exercise the tiled / megacore / ragged-tail (masked) path.
    k3, k4 = jax.random.split(jax.random.PRNGKey(1))
    x2 = jax.random.normal(k3, (2, 8, 160, 160), dtype=jnp.float32)
    t2 = jax.random.normal(k4, (2, 8, 160, 160), dtype=jnp.float32)
    out2 = kld_loss(x2, t2)
    jax.block_until_ready(out2)
    ref2 = _reference(x2, t2)
    assert jnp.allclose(out2, ref2, rtol=5e-5, atol=1e-6), (out2, ref2)

    # Exercise the non-128-aligned fallback path.
    k5, k6 = jax.random.split(jax.random.PRNGKey(2))
    x3 = jax.random.normal(k5, (2, 3, 20, 20), dtype=jnp.float32)
    t3 = jax.random.normal(k6, (2, 3, 20, 20), dtype=jnp.float32)
    out3 = kld_loss(x3, t3)
    jax.block_until_ready(out3)
    ref3 = _reference(x3, t3)
    assert jnp.allclose(out3, ref3, rtol=5e-5, atol=1e-6), (out3, ref3)

    print("KERNEL_OK")
</pallas_src>

<mosaic_0001>
module attributes {stable_mosaic.version = 11 : i64} {
  func.func @kernel(%arg0: i32, %arg1: i32, %arg2: memref<4x512xf32, #tpu.memory_space<vmem>>, %arg3: memref<4x512xf32, #tpu.memory_space<vmem>>, %arg4: memref<1x1x512xf32, #tpu.memory_space<vmem>>) attributes {dimension_semantics = [#tpu.dimension_semantics<parallel>, #tpu.dimension_semantics<arbitrary>], iteration_bounds = array<i64: 1, 1>, scalar_prefetch = 0 : i64, scratch_operands = 0 : i64, tpu.core_type = #tpu.core_type<tc>, window_params = [{transform_indices = @transform_0, window_bounds = array<i64: 4, 512>}, {transform_indices = @transform_1, window_bounds = array<i64: 4, 512>}, {transform_indices = @transform_2, window_bounds = array<i64: 1, 1, 512>}]} {
    %c0_i32 = arith.constant 0 : i32
    %0 = arith.cmpi eq, %arg1, %c0_i32 : i32
    %1 = arith.extui %0 : i1 to i32
    %c0_i32_0 = arith.constant 0 : i32
    %2 = arith.cmpi ne, %1, %c0_i32_0 : i32
    scf.if %2 {
      %cst_14 = arith.constant 0.000000e+00 : f32
      %33 = vector.broadcast %cst_14 : f32 to vector<1x1x512xf32>
      %c0_15 = arith.constant 0 : index
      %c0_16 = arith.constant 0 : index
      %c0_17 = arith.constant 0 : index
      %34 = vector.load %arg4[%c0_15, %c0_16, %c0_17] : memref<1x1x512xf32, #tpu.memory_space<vmem>>, vector<1x1x512xf32>
      tpu.vector_store %arg4[%c0_15, %c0_16, %c0_17], %33 {strides = array<i32>} : memref<1x1x512xf32, #tpu.memory_space<vmem>>, vector<1x1x512xf32>,
    } else {
    }
    %c0 = arith.constant 0 : index
    %c0_1 = arith.constant 0 : index
    %3 = vector.load %arg2[%c0, %c0_1] : memref<4x512xf32, #tpu.memory_space<vmem>>, vector<4x512xf32>
    %c0_2 = arith.constant 0 : index
    %c0_3 = arith.constant 0 : index
    %4 = vector.load %arg3[%c0_2, %c0_3] : memref<4x512xf32, #tpu.memory_space<vmem>>, vector<4x512xf32>
    %cst = arith.constant 0.000000e+00 : f32
    %5 = vector.broadcast %cst : f32 to vector<4x512xf32>
    %6 = arith.maximumf %3, %5 : vector<4x512xf32>
    %7 = math.absf %3 : vector<4x512xf32>
    %cst_4 = arith.constant 0.000000e+00 : f32
    %8 = vector.broadcast %cst_4 : f32 to vector<4x512xf32>
    %9 = arith.subf %8, %7 : vector<4x512xf32>
    %10 = math.exp %9 : vector<4x512xf32>
    %11 = math.log1p %10 : vector<4x512xf32>
    %12 = arith.addf %6, %11 : vector<4x512xf32>
    %cst_5 = arith.constant 0.000000e+00 : f32
    %13 = vector.broadcast %cst_5 : f32 to vector<4x512xf32>
    %14 = arith.maximumf %4, %13 : vector<4x512xf32>
    %15 = math.absf %4 : vector<4x512xf32>
    %cst_6 = arith.constant 0.000000e+00 : f32
    %16 = vector.broadcast %cst_6 : f32 to vector<4x512xf32>
    %17 = arith.subf %16, %15 : vector<4x512xf32>
    %18 = math.exp %17 : vector<4x512xf32>
    %19 = math.log1p %18 : vector<4x512xf32>
    %20 = arith.addf %14, %19 : vector<4x512xf32>
    %21 = arith.subf %4, %20 : vector<4x512xf32>
    %22 = math.exp %21 : vector<4x512xf32>
    %23 = arith.subf %4, %3 : vector<4x512xf32>
    %24 = arith.mulf %22, %23 : vector<4x512xf32>
    %25 = arith.subf %12, %20 : vector<4x512xf32>
    %26 = arith.addf %24, %25 : vector<4x512xf32>
    %cst_7 = arith.constant dense<0.000000e+00> : vector<512xf32>
    %27 = vector.multi_reduction <add>, %26, %cst_7 [0] : vector<4x512xf32> to vector<512xf32>
    %28 = vector.shape_cast %27 : vector<512xf32> to vector<1x512xf32>
    %c0_8 = arith.constant 0 : index
    %c0_9 = arith.constant 0 : index
    %c0_10 = arith.constant 0 : index
    %29 = vector.load %arg4[%c0_8, %c0_9, %c0_10] : memref<1x1x512xf32, #tpu.memory_space<vmem>>, vector<1x1x512xf32>
    %30 = vector.shape_cast %28 : vector<1x512xf32> to vector<1x1x512xf32>
    %31 = arith.addf %29, %30 : vector<1x1x512xf32>
    %c0_11 = arith.constant 0 : index
    %c0_12 = arith.constant 0 : index
    %c0_13 = arith.constant 0 : index
    %32 = vector.load %arg4[%c0_11, %c0_12, %c0_13] : memref<1x1x512xf32, #tpu.memory_space<vmem>>, vector<1x1x512xf32>
    tpu.vector_store %arg4[%c0_11, %c0_12, %c0_13], %31 {strides = array<i32>} : memref<1x1x512xf32, #tpu.memory_space<vmem>>, vector<1x1x512xf32>,
    return
  }
  func.func @transform_0(%arg0: i32, %arg1: i32) -> (i32, i32) {
    %c1_i32 = arith.constant 1 : i32
    %0 = arith.muli %arg0, %c1_i32 : i32
    %1 = arith.addi %0, %arg1 : i32
    %c0_i32 = arith.constant 0 : i32
    %2 = arith.minsi %1, %c0_i32 : i32
    %c0_i32_0 = arith.constant 0 : i32
    %c0_i32_1 = arith.constant 0 : i32
    return %2, %c0_i32_0 : i32, i32
  }
  func.func @transform_1(%arg0: i32, %arg1: i32) -> (i32, i32) {
    %c1_i32 = arith.constant 1 : i32
    %0 = arith.muli %arg0, %c1_i32 : i32
    %1 = arith.addi %0, %arg1 : i32
    %c0_i32 = arith.constant 0 : i32
    %2 = arith.minsi %1, %c0_i32 : i32
    %c0_i32_0 = arith.constant 0 : i32
    %c0_i32_1 = arith.constant 0 : i32
    return %2, %c0_i32_0 : i32, i32
  }
  func.func @transform_2(%arg0: i32, %arg1: i32) -> (i32, i32, i32) {
    %c0_i32 = arith.constant 0 : i32
    %c0_i32_0 = arith.constant 0 : i32
    %c0_i32_1 = arith.constant 0 : i32
    return %arg0, %c0_i32, %c0_i32_0 : i32, i32, i32
  }
}

</mosaic_0001>

<llo_original>
// kernel: tpu_custom_call.1
$region0: #{tpu_custom_call.1}
  #allocation0 [shape = 'u32[]', space=smem, size = 0x4, offset = 0x4, fixed_abs, tag = 'smem constant byte address 0x4 - core index']
  #allocation1 [shape = 'u32[72,128]{1,0:T(1,128)}', space=vmem, size = 0x9000, scoped, tag = 'internal scratch']
  %s0 = inlined_call_operand.hbm [shape: f32[4,512], index: 0, kind: input, shape index: {}]
  %s1 = inlined_call_operand.hbm [shape: f32[4,512], index: 1, kind: input, shape index: {}]
  %s2 = inlined_call_operand.hbm [shape: f32[1,1,512], index: 2, kind: output, shape index: {}]
  %s3 = sld [smem:[#allocation0]]
  $region30: #{tpu_custom_call.1} parent=0
    _
  %s5 = ssub.s32 1, %s3
  %s6 = scalar_select 0, %s5, %s3
  $region1: #{tpu_custom_call.1} parent=0
    #allocation2 [shape = 'u8[8192]{0}', space=vmem, size = 0x2000, scoped, tag = 'input window, operand 0, single buffered']
    #allocation3 [shape = 's32[1]{0}', space=sflag, size = 0x4, scoped, tag = 'scoped memory for tpu_custom_call.1']
    #allocation4 [shape = 's32[1]{0}', space=sflag, size = 0x4, scoped, tag = 'scoped memory for tpu_custom_call.1']
    #allocation5 [shape = 'u8[8192]{0}', space=vmem, size = 0x2000, scoped, tag = 'input window, operand 1, single buffered']
    #allocation6 [shape = 's32[1]{0}', space=sflag, size = 0x4, scoped, tag = 'scoped memory for tpu_custom_call.1']
    #allocation7 [shape = 'u8[2048]{0}', space=vmem, size = 0x800, scoped, tag = 'output window, operand 0, single buffered']
    %7 = vsyncpa [#allocation3], 0
    %8 = vsyncpa [#allocation6], 0
    %9 = vsyncpa [#allocation4], 0
    // Predicated region
    $region2: #{tpu_custom_call.1} parent=1 // pred_check
      _
    $region3: #{tpu_custom_call.1} parent=1 // pred_check_branch
      %11 = sbr.rel (0) target = $region5
    $region4: #{tpu_custom_call.1} parent=1 // pred_region
      %s12 = sadd.s32 0, 0
      %p13 = scmp.lt.s32.totalorder %s12, 0
      %s14 = scalar_select %p13, %s12, 0
      %16 = vsyncadd [#allocation3], 0
      %s17 = smul.addr %s14, 4
      %s18 = smul.addr %s17, 4
      %s19 = scalar_lea.hbm %s0, %s18
      %s21 = sshll.u32 %s19, 4
      %s22 = int_to_ptr.hbm [resolvable:$true] %s21
      %s23 = sshll.u32 [#allocation2], 4
      %s24 = int_to_ptr.vmem [resolvable:$true] %s23
      %26 = dma.hbm_to_vmem [thread:$0]  %s22, 256, %s24, [#allocation3]
    $region5: #{tpu_custom_call.1} parent=1 // pred_fallthru
      _
    // Predicated region
    $region6: #{tpu_custom_call.1} parent=1 // pred_check
      _
    $region7: #{tpu_custom_call.1} parent=1 // pred_check_branch
      %28 = sbr.rel (0) target = $region9
    $region8: #{tpu_custom_call.1} parent=1 // pred_region
      %s29 = sadd.s32 0, 0
      %p30 = scmp.lt.s32.totalorder %s29, 0
      %s31 = scalar_select %p30, %s29, 0
      %33 = vsyncadd [#allocation6], 0
      %s34 = smul.addr %s31, 4
      %s35 = smul.addr %s34, 4
      %s36 = scalar_lea.hbm %s1, %s35
      %s38 = sshll.u32 %s36, 4
      %s39 = int_to_ptr.hbm [resolvable:$true] %s38
      %s40 = sshll.u32 [#allocation5], 4
      %s41 = int_to_ptr.vmem [resolvable:$true] %s40
      %43 = dma.hbm_to_vmem [thread:$0]  %s39, 256, %s41, [#allocation6]
    $region9: #{tpu_custom_call.1} parent=1 // pred_fallthru
      _
    // Predicated region
    $region10: #{tpu_custom_call.1} parent=1 // pred_check
      _
    $region11: #{tpu_custom_call.1} parent=1 // pred_check_branch
      %45 = sbr.rel (0) target = $region13
    $region12: #{tpu_custom_call.1} parent=1 // pred_region
      %47 = dma.done [#allocation3], 256
    $region13: #{tpu_custom_call.1} parent=1 // pred_fallthru
      _
    // Predicated region
    $region14: #{tpu_custom_call.1} parent=1 // pred_check
      _
    $region15: #{tpu_custom_call.1} parent=1 // pred_check_branch
      %49 = sbr.rel (0) target = $region17
    $region16: #{tpu_custom_call.1} parent=1 // pred_region
      %51 = dma.done [#allocation6], 256
    $region17: #{tpu_custom_call.1} parent=1 // pred_fallthru
      _
    %s52 = sadd.s32 0, 0
    %p53 = scmp.lt.s32.totalorder %s52, 0
    %s54 = scalar_select %p53, %s52, 0
    %s55 = sadd.s32 0, 0
    %p56 = scmp.lt.s32.totalorder %s55, 0
    %s57 = scalar_select %p56, %s55, 0
    %p58 = scmp.eq.s32.totalorder 0, 0
    // Predicated region
    $region18: #{tpu_custom_call.1} parent=1 // pred_check
      %p59 = pneg %p58
    $region19: #{tpu_custom_call.1} parent=1 // pred_check_branch
      %61 = sbr.rel (%p59) target = $region21
    $region20: #{tpu_custom_call.1} parent=1 // pred_region
      %v62 = vlaneseq
      %vm63 = vcmp.ge.s32.totalorder %v62, 0
      %vm64 = vcmp.lt.s32.totalorder %v62, 512
      %vm65 = vmand %vm63, %vm64
      %66 = vst.msk [vmem:[#allocation7] sm:$0xf] %vm65, 0.0
    $region21: #{tpu_custom_call.1} parent=1 // pred_fallthru
      _
    %v67 = vld [vmem:[#allocation2] sm:$0xff]
    %v68 = vld [vmem:[#allocation2 + $0x8] sm:$0xff]
    %v69 = vld [vmem:[#allocation5] sm:$0xff]
    %v70 = vld [vmem:[#allocation5 + $0x8] sm:$0xff]
    %v71 = vmax.f32 %v67, 0.0
    %v72 = vmax.f32 %v68, 0.0
    %v73 = vand.u32 2147483647, %v67
    %v74 = vand.u32 2147483647, %v68
    %v75 = vsub.f32 0.0, %v73
    %v76 = vsub.f32 0.0, %v74
    %v77 = vmul.f32 %v75, 1.442695
    %v78 = vpow.pop %v77
    %v79 = vmul.f32 %v76, 1.442695
    %v80 = vpow.pop %v79
    %v81 = vadd.f32 %v78, 1.0
    %v82 = vlog2.pop %v81
    %v83 = vmul.f32 %v82, 0.6931472
    %v84 = vmul.f32 -0.5, %v78
    %v85 = vadd.f32 %v84, 1.0
    %v86 = vmul.f32 %v85, %v78
    %v87 = vand.u32 2147483647, %v78
    %vm88 = vcmp.lt.f32.partialorder %v87, 0.0004427343
    %v89 = vsel %vm88, %v86, %v83
    %v90 = vadd.f32 %v80, 1.0
    %v91 = vlog2.pop %v90
    %v92 = vmul.f32 %v91, 0.6931472
    %v93 = vmul.f32 -0.5, %v80
    %v94 = vadd.f32 %v93, 1.0
    %v95 = vmul.f32 %v94, %v80
    %v96 = vand.u32 2147483647, %v80
    %vm97 = vcmp.lt.f32.partialorder %v96, 0.0004427343
    %v98 = vsel %vm97, %v95, %v92
    %v99 = vadd.f32 %v71, %v89
    %v100 = vadd.f32 %v72, %v98
    %v101 = vmax.f32 %v69, 0.0
    %v102 = vmax.f32 %v70, 0.0
    %v103 = vand.u32 2147483647, %v69
    %v104 = vand.u32 2147483647, %v70
    %v105 = vsub.f32 0.0, %v103
    %v106 = vsub.f32 0.0, %v104
    %v107 = vmul.f32 %v105, 1.442695
    %v108 = vpow.pop %v107
    %v109 = vmul.f32 %v106, 1.442695
    %v110 = vpow.pop %v109
    %v111 = vadd.f32 %v108, 1.0
    %v112 = vlog2.pop %v111
    %v113 = vmul.f32 %v112, 0.6931472
    %v114 = vmul.f32 -0.5, %v108
    %v115 = vadd.f32 %v114, 1.0
    %v116 = vmul.f32 %v115, %v108
    %v117 = vand.u32 2147483647, %v108
    %vm118 = vcmp.lt.f32.partialorder %v117, 0.0004427343
    %v119 = vsel %vm118, %v116, %v113
    %v120 = vadd.f32 %v110, 1.0
    %v121 = vlog2.pop %v120
    %v122 = vmul.f32 %v121, 0.6931472
    %v123 = vmul.f32 -0.5, %v110
    %v124 = vadd.f32 %v123, 1.0
    %v125 = vmul.f32 %v124, %v110
    %v126 = vand.u32 2147483647, %v110
    %vm127 = vcmp.lt.f32.partialorder %v126, 0.0004427343
    %v128 = vsel %vm127, %v125, %v122
    %v129 = vadd.f32 %v101, %v119
    %v130 = vadd.f32 %v102, %v128
    %v131 = vsub.f32 %v69, %v129
    %v132 = vsub.f32 %v70, %v130
    %v133 = vmul.f32 %v131, 1.442695
    %v134 = vpow.pop %v133
    %v135 = vmul.f32 %v132, 1.442695
    %v136 = vpow.pop %v135
    %v137 = vsub.f32 %v69, %v67
    %v138 = vsub.f32 %v70, %v68
    %v139 = vmul.f32 %v134, %v137
    %v140 = vmul.f32 %v136, %v138
    %v141 = vsub.f32 %v99, %v129
    %v142 = vsub.f32 %v100, %v130
    %v143 = vadd.f32 %v139, %v141
    %v144 = vadd.f32 %v140, %v142
    %147 = vst [vmem:[#allocation1] ss:$2 sm:$0xff] %v143
    %s148 = scalar_lea.vmem [#allocation1], 16
    %149 = vst [vmem:[%s148] ss:$2 sm:$0xff] %v144
    %v150 = vld.sshfl [vmem:[#allocation1] sm:$0xff pattern:$0x75316420]
    %v151 = vld.sshfl [vmem:[#allocation1 + $0x8] sm:$0xff pattern:$0x75316420]
    %v152 = vld.sshfl [vmem:[#allocation1 + $0x10] sm:$0xff pattern:$0x75316420]
    %v153 = vld.sshfl [vmem:[#allocation1 + $0x18] sm:$0xff pattern:$0x75316420]
    %vm158 = vcmask 1043456
    %v159 = vsel %vm158, %v150, 0.0
    %v160 = vrot.slane %v159, 4
    %v161 = vadd.f32 %v159, %v160
    %v162 = vrot.slane %v161, 2
    %v163 = vadd.f32 %v161, %v162
    %v164 = vrot.slane %v163, 1
    %v165 = vadd.f32 %v163, %v164
    %v166 = vsel %vm158, %v151, 0.0
    %v167 = vrot.slane %v166, 4
    %v168 = vadd.f32 %v166, %v167
    %v169 = vrot.slane %v168, 2
    %v170 = vadd.f32 %v168, %v169
    %v171 = vrot.slane %v170, 1
    %v172 = vadd.f32 %v170, %v171
    %v173 = vsel %vm158, %v152, 0.0
    %v174 = vrot.slane %v173, 4
    %v175 = vadd.f32 %v173, %v174
    %v176 = vrot.slane %v175, 2
    %v177 = vadd.f32 %v175, %v176
    %v178 = vrot.slane %v177, 1
    %v179 = vadd.f32 %v177, %v178
    %v180 = vsel %vm158, %v153, 0.0
    %v181 = vrot.slane %v180, 4
    %v182 = vadd.f32 %v180, %v181
    %v183 = vrot.slane %v182, 2
    %v184 = vadd.f32 %v182, %v183
    %v185 = vrot.slane %v184, 1
    %v186 = vadd.f32 %v184, %v185
    %v187 = vld [vmem:[#allocation7] sm:$0xf]
    %v192 = vrot.slane %v172, 7
    %v193 = vrot.slane %v179, 6
    %v194 = vrot.slane %v186, 5
    %vm195 = vcmask 1040384
    %v196 = vsel %vm195, %v165, %v192
    %vm197 = vcmask 1042434
    %v198 = vsel %vm197, %v193, %v194
    %vm199 = vcmask 1041408
    %v200 = vsel %vm199, %v196, %v198
    %v202 = vadd.f32 %v187, %v200
    %v203 = vlaneseq
    %vm204 = vcmp.ge.s32.totalorder %v203, 0
    %vm205 = vcmp.lt.s32.totalorder %v203, 512
    %vm206 = vmand %vm204, %vm205
    %207 = vst.msk [vmem:[#allocation7] sm:$0xf] %vm206, %v202
    // Predicated region
    $region22: #{tpu_custom_call.1} parent=1 // pred_check
      _
    $region23: #{tpu_custom_call.1} parent=1 // pred_check_branch
      %209 = sbr.rel (0) target = $region25
    $region24: #{tpu_custom_call.1} parent=1 // pred_region
      %211 = vsyncadd [#allocation4], 0
      %s213 = sshll.u32 [#allocation7], 4
      %s214 = int_to_ptr.vmem [resolvable:$true] %s213
      %s215 = sshll.u32 %s2, 4
      %s216 = int_to_ptr.hbm [resolvable:$true] %s215
      %218 = dma.vmem_to_hbm [thread:$0]  %s214, 64, %s216, [#allocation4]
    $region25: #{tpu_custom_call.1} parent=1 // pred_fallthru
      _
    // Predicated region
    $region26: #{tpu_custom_call.1} parent=1 // pred_check
      _
    $region27: #{tpu_custom_call.1} parent=1 // pred_check_branch
      %220 = sbr.rel (0) target = $region29
    $region28: #{tpu_custom_call.1} parent=1 // pred_region
      %222 = dma.done [#allocation4], 64
    $region29: #{tpu_custom_call.1} parent=1 // pred_fallthru
      _
    %223 = vsyncpa [#allocation3], 1
    %224 = vsyncpa [#allocation6], 1
    %225 = vsyncpa [#allocation4], 1

</llo_original>
